<compile_context>
chip_gen: v7x
topology: tpu7x:2x2x1
jax: 0.10.0
libtpu: 0.0.40
codegen_flags: <defaults>
</compile_context>

<pallas_src>
import functools

import jax
import jax.numpy as jnp
from jax.experimental import pallas as pl
from jax.experimental.pallas import tpu as pltpu


def _head_kernel(x_ref, w_ref, b_ref, o_ref, *, inv_hw):
    # x_ref: (TILE_N, C, HW) in the input dtype
    # w_ref: (C, K_pad) f32 (transposed PyTorch weight, zero-padded columns)
    # b_ref: (1, K_pad) f32
    # o_ref: (TILE_N, K_pad) f32
    # Average pool: f32-accumulated sum over HW (lanes -> XLU reduce), then scale.
    pooled = jnp.sum(x_ref[...], axis=-1, dtype=jnp.float32) * inv_hw   # (TILE_N, C)
    # Dropout in eval mode is identity.
    out = jnp.dot(pooled, w_ref[...], preferred_element_type=jnp.float32)  # MXU
    o_ref[...] = out + b_ref[...]                                          # bias broadcast


def _round_up(a, b):
    return ((a + b - 1) // b) * b


def _vmem_block_bytes(rows, c, hw, itemsize):
    """VMEM footprint of one (rows, c, hw) block after sublane/lane padding."""
    sublane = max(8, 32 // itemsize)          # f32: 8, bf16: 16, int8/fp8: 32
    return rows * _round_up(max(c, 1), sublane) * _round_up(max(hw, 1), 128) * itemsize


def _vmem_capacity_bytes():
    try:
        return int(pltpu.get_tpu_info().vmem_capacity_bytes)
    except Exception:
        return 64 << 20                        # conservative: v7x = 64 MiB per TC


def _choose_tile_n(n_rows, per_row_vmem_bytes, vmem_capacity):
    """Batch-tile rows, budgeted against the padded-VMEM footprint."""
    # Per-x-block target ~VMEM/16: ≈4 MiB on v7x (64 MiB), ≈8 MiB on v5e/v6e (128 MiB).
    target = min(max(vmem_capacity // 16, 4 << 20), 16 << 20)
    t = max(1, target // max(1, per_row_vmem_bytes))
    t = min(t, 2048)                           # amortize ~0.35us/step without huge blocks
    if n_rows >= 16:
        # Keep at least 2 (ideally 4) grid steps: both v7x TCs get work on the
        # "parallel" batch axis and the pipeline actually overlaps DMA/compute.
        want_blocks = 4 if n_rows >= 64 else 2
        t = min(t, max(8, _round_up(-(-n_rows // want_blocks), 8)))
    if t >= n_rows:
        return n_rows                          # single full block (any size is legal)
    return max(8, (t // 8) * 8)                # multiple of 8 (out-block sublane rule)


def linear_classification_head(x_in, weight, bias, *, tile_n=None):
    """x_in: (N, C, H, W) or already-pooled (N, C); weight: (nbClass, nbFeat); bias: (nbClass,)."""
    if x_in.ndim == 4:
        N, C, H, W = x_in.shape
        HW = H * W
        # Free layout change (contiguous trailing dims, no HBM copy): NCHW -> (N, C, HW).
        x = x_in.reshape(N, C, HW)
    else:                                      # already-pooled features, skip the pool
        N, C = x_in.shape
        HW = 1
        x = x_in.reshape(N, C, 1)
    K = weight.shape[0]
    itemsize = jnp.dtype(x.dtype).itemsize

    # Pad nbClass to a lane-dense multiple of 128 (unmasked stores, full MXU width).
    K_pad = _round_up(max(K, 1), 128)
    w_t = jnp.asarray(weight, jnp.float32).T                      # (C, K)
    w_t = jnp.pad(w_t, ((0, 0), (0, K_pad - K)))                  # (C, K_pad)
    b = jnp.pad(jnp.asarray(bias, jnp.float32), (0, K_pad - K)).reshape(1, K_pad)

    # Batch tiling budgeted against the padded VMEM layout (+ f32 pool temp).
    vmem_cap = _vmem_capacity_bytes()
    per_row = _vmem_block_bytes(1, C, HW, itemsize)
    if x.dtype != jnp.float32:
        per_row += _vmem_block_bytes(1, C, HW, 4)  # f32 accumulation temp in the reduce
    if tile_n is None:
        tile_n = _choose_tile_n(N, per_row, vmem_cap)
    if tile_n >= N:
        tile_n = N
    elif tile_n % 8 != 0:
        tile_n = max(8, (tile_n // 8) * 8)

    n_blocks = pl.cdiv(N, tile_n)
    n_buf_x = 3 if n_blocks >= 4 else 2        # extra x buffer only when it can pay off

    # Right-sized VMEM limit: actual requirement + margin, capped below physical.
    x_vmem = n_buf_x * _vmem_block_bytes(tile_n, C, HW, itemsize)
    f32_tmp = 0 if x.dtype == jnp.float32 else _vmem_block_bytes(tile_n, C, HW, 4)
    out_vmem = 2 * _round_up(tile_n, 8) * K_pad * 4
    w_vmem = _round_up(C, 8) * K_pad * 4
    b_vmem = 8 * K_pad * 4
    required = x_vmem + f32_tmp + out_vmem + w_vmem + b_vmem
    hard_cap = max(32 << 20, min(vmem_cap - (16 << 20), 96 << 20))   # 48 MiB v7x, 96 MiB v5e/v6e
    vmem_limit = int(min(max(required + (8 << 20), 32 << 20), hard_cap))
    vmem_limit = int(max(vmem_limit, required + (4 << 20)))

    if n_buf_x >= 3:
        x_spec = pl.BlockSpec((tile_n, C, HW), lambda i: (i, 0, 0),
                              pipeline_mode=pl.Buffered(n_buf_x))
    else:
        x_spec = pl.BlockSpec((tile_n, C, HW), lambda i: (i, 0, 0))

    out_padded = pl.pallas_call(
        functools.partial(_head_kernel, inv_hw=1.0 / float(HW)),
        out_shape=jax.ShapeDtypeStruct((N, K_pad), jnp.float32),
        grid_spec=pl.GridSpec(
            grid=(n_blocks,),
            in_specs=[
                x_spec,                                          # batch-tiled x (no transpose, no pad)
                pl.BlockSpec((C, K_pad), lambda i: (0, 0)),      # resident weight
                pl.BlockSpec((1, K_pad), lambda i: (0, 0)),      # resident bias
            ],
            out_specs=pl.BlockSpec((tile_n, K_pad), lambda i: (i, 0)),
        ),
        compiler_params=pltpu.CompilerParams(
            dimension_semantics=("parallel",),                   # shard batch tiles across TCs
            vmem_limit_bytes=vmem_limit),
    )(x, w_t, b)

    # Ragged-tail rows / padded class columns are sliced off here, before any read.
    return out_padded[:N, :K]


if __name__ == "__main__":
    # Shapes consistent with the module: batch=2, nbFeat(C)=4, spatial=16x16, nbClass=10
    N, C, H, W, K = 2, 4, 16, 16, 10

    key = jax.random.PRNGKey(0)
    kx, kw, kb = jax.random.split(key, 3)

    x = jax.random.normal(kx, (N, C, H, W), dtype=jnp.float32)
    # PyTorch Linear shapes: weight (K, C), bias (K,)
    bound = 1.0 / float(C) ** 0.5
    weight = jax.random.uniform(kw, (K, C), minval=-bound, maxval=bound, dtype=jnp.float32)
    bias = jax.random.uniform(kb, (K,), minval=-bound, maxval=bound, dtype=jnp.float32)

    pred = linear_classification_head(x, weight, bias)
    pred = jax.block_until_ready(pred)

    # Reference check in plain JAX (avgpool -> linear)
    pooled_ref = jnp.mean(x.astype(jnp.float32), axis=(2, 3))
    pred_ref = pooled_ref @ weight.T + bias
    assert pred.shape == (N, K), "wrong output shape"
    assert jnp.allclose(pred, pred_ref, atol=1e-4), "mismatch vs reference"

    # Second check: multi-block pipeline + ragged (unpadded) batch tail.
    N2 = 20
    x2 = jax.random.normal(jax.random.PRNGKey(1), (N2, C, H, W), dtype=jnp.float32)
    pred2 = jax.block_until_ready(linear_classification_head(x2, weight, bias, tile_n=8))
    pred2_ref = jnp.mean(x2, axis=(2, 3)) @ weight.T + bias
    assert pred2.shape == (N2, K), "wrong output shape (ragged batch)"
    assert jnp.allclose(pred2, pred2_ref, atol=1e-4), "mismatch vs reference (ragged batch)"

    retDict = {"pred": pred}  # matches the module's returned dict structure
    print("KERNEL_OK")
</pallas_src>

<mosaic_0001>
module attributes {stable_mosaic.version = 11 : i64} {
  func.func @_head_kernel(%arg0: i32, %arg1: memref<2x4x256xf32, #tpu.memory_space<vmem>>, %arg2: memref<4x128xf32, #tpu.memory_space<vmem>>, %arg3: memref<1x128xf32, #tpu.memory_space<vmem>>, %arg4: memref<2x128xf32, #tpu.memory_space<vmem>>) attributes {dimension_semantics = [#tpu.dimension_semantics<parallel>], iteration_bounds = array<i64: 1>, scalar_prefetch = 0 : i64, scratch_operands = 0 : i64, tpu.core_type = #tpu.core_type<tc>, window_params = [{transform_indices = @transform_0, window_bounds = array<i64: 2, 4, 256>}, {pipeline_mode = #tpu.pipeline_mode<synchronous>, transform_indices = @transform_1, window_bounds = array<i64: 4, 128>}, {pipeline_mode = #tpu.pipeline_mode<synchronous>, transform_indices = @transform_2, window_bounds = array<i64: 1, 128>}, {transform_indices = @transform_3, window_bounds = array<i64: 2, 128>}]} {
    %c0 = arith.constant 0 : index
    %c0_0 = arith.constant 0 : index
    %c0_1 = arith.constant 0 : index
    %0 = vector.load %arg1[%c0, %c0_0, %c0_1] : memref<2x4x256xf32, #tpu.memory_space<vmem>>, vector<2x4x256xf32>
    %cst = arith.constant dense<0.000000e+00> : vector<2x4xf32>
    %1 = vector.multi_reduction <add>, %0, %cst [2] : vector<2x4x256xf32> to vector<2x4xf32>
    %cst_2 = arith.constant 3.906250e-03 : f32
    %2 = vector.broadcast %cst_2 : f32 to vector<2x4xf32>
    %3 = arith.mulf %1, %2 : vector<2x4xf32>
    %c0_3 = arith.constant 0 : index
    %c0_4 = arith.constant 0 : index
    %4 = vector.load %arg2[%c0_3, %c0_4] : memref<4x128xf32, #tpu.memory_space<vmem>>, vector<4x128xf32>
    %cst_5 = arith.constant dense<0.000000e+00> : vector<2x128xf32>
    %5 = tpu.matmul %3, %4, %cst_5 {dimension_numbers = #tpu.dot_dimension_numbers<[1], [0], [0], [1], [0, 0, 1, 1], [], []>} : vector<2x4xf32>, vector<4x128xf32>, vector<2x128xf32> -> vector<2x128xf32>
    %c0_6 = arith.constant 0 : index
    %c0_7 = arith.constant 0 : index
    %6 = vector.load %arg3[%c0_6, %c0_7] : memref<1x128xf32, #tpu.memory_space<vmem>>, vector<1x128xf32>
    %7 = vector.broadcast %6 : vector<1x128xf32> to vector<2x128xf32>
    %8 = arith.addf %5, %7 : vector<2x128xf32>
    %c0_8 = arith.constant 0 : index
    %c0_9 = arith.constant 0 : index
    %9 = vector.load %arg4[%c0_8, %c0_9] : memref<2x128xf32, #tpu.memory_space<vmem>>, vector<2x128xf32>
    tpu.vector_store %arg4[%c0_8, %c0_9], %8 {strides = array<i32>} : memref<2x128xf32, #tpu.memory_space<vmem>>, vector<2x128xf32>,
    return
  }
  func.func @transform_0(%arg0: i32) -> (i32, i32, i32) {
    %c0_i32 = arith.constant 0 : i32
    %c0_i32_0 = arith.constant 0 : i32
    %c0_i32_1 = arith.constant 0 : i32
    return %arg0, %c0_i32, %c0_i32_0 : i32, i32, i32
  }
  func.func @transform_1(%arg0: i32) -> (i32, i32) {
    %c0_i32 = arith.constant 0 : i32
    %c0_i32_0 = arith.constant 0 : i32
    %c0_i32_1 = arith.constant 0 : i32
    return %c0_i32, %c0_i32_0 : i32, i32
  }
  func.func @transform_2(%arg0: i32) -> (i32, i32) {
    %c0_i32 = arith.constant 0 : i32
    %c0_i32_0 = arith.constant 0 : i32
    %c0_i32_1 = arith.constant 0 : i32
    return %c0_i32, %c0_i32_0 : i32, i32
  }
  func.func @transform_3(%arg0: i32) -> (i32, i32) {
    %c0_i32 = arith.constant 0 : i32
    %c0_i32_0 = arith.constant 0 : i32
    return %arg0, %c0_i32 : i32, i32
  }
}

</mosaic_0001>

<llo_original>
// kernel: tpu_custom_call.1
$region0: #{tpu_custom_call.1}
  #allocation0 [shape = 'u32[]', space=smem, size = 0x4, offset = 0x4, fixed_abs, tag = 'smem constant byte address 0x4 - core index']
  #allocation1 [shape = 'u32[144,128]{1,0:T(1,128)}', space=vmem, size = 0x12000, scoped, tag = 'internal scratch']
  %s0 = inlined_call_operand.hbm [shape: f32[2,4,256], index: 0, kind: input, shape index: {}]
  %s1 = inlined_call_operand.hbm [shape: f32[4,128], index: 1, kind: input, shape index: {}]
  %s2 = inlined_call_operand.vmem [shape: f32[1,128], index: 2, kind: input, shape index: {}]
  %s3 = inlined_call_operand.hbm [shape: f32[2,128], index: 3, kind: output, shape index: {}]
  %s4 = sld [smem:[#allocation0]]
  $region30: #{tpu_custom_call.1} parent=0
    _
  %s6 = ssub.s32 1, %s4
  %s7 = scalar_select 0, %s6, %s4
  $region1: #{tpu_custom_call.1} parent=0
    #allocation2 [shape = 'u8[8192]{0}', space=vmem, size = 0x2000, scoped, tag = 'input window, operand 0, single buffered']
    #allocation3 [shape = 's32[1]{0}', space=sflag, size = 0x4, scoped, tag = 'scoped memory for tpu_custom_call.1']
    #allocation4 [shape = 's32[1]{0}', space=sflag, size = 0x4, scoped, tag = 'scoped memory for tpu_custom_call.1']
    #allocation5 [shape = 'u8[2048]{0}', space=vmem, size = 0x800, scoped, tag = 'input window, operand 1, single buffered']
    #allocation6 [shape = 's32[1]{0}', space=sflag, size = 0x4, scoped, tag = 'scoped memory for tpu_custom_call.1']
    #allocation7 [shape = 'u8[1024]{0}', space=vmem, size = 0x400, scoped, tag = 'output window, operand 0, single buffered']
    %8 = vsyncpa [#allocation3], 0
    %9 = vsyncpa [#allocation6], 0
    %10 = vsyncpa [#allocation4], 0
    // Predicated region
    $region2: #{tpu_custom_call.1} parent=1 // pred_check
      _
    $region3: #{tpu_custom_call.1} parent=1 // pred_check_branch
      %12 = sbr.rel (0) target = $region5
    $region4: #{tpu_custom_call.1} parent=1 // pred_region
      %s14 = ssub.s32 256, 256
      %15 = vsyncadd [#allocation3], %s14
      %s16 = sshll.u32 [#allocation2], 4
      %s17 = int_to_ptr.vmem [resolvable:$true] %s16
      %22 = dma.hbm_to_vmem [thread:$0]  %s0, 256, %s17, [#allocation3], 128, 128, 8
    $region5: #{tpu_custom_call.1} parent=1 // pred_fallthru
      _
    // Predicated region
    $region6: #{tpu_custom_call.1} parent=1 // pred_check
      _
    $region7: #{tpu_custom_call.1} parent=1 // pred_check_branch
      %24 = sbr.rel (0) target = $region9
    $region8: #{tpu_custom_call.1} parent=1 // pred_region
      %s26 = ssub.s32 64, 64
      %27 = vsyncadd [#allocation6], %s26
      %s29 = sshll.u32 [#allocation5], 4
      %s30 = int_to_ptr.vmem [resolvable:$true] %s29
      %32 = dma.hbm_to_vmem [thread:$0]  %s1, 64, %s30, [#allocation6]
    $region9: #{tpu_custom_call.1} parent=1 // pred_fallthru
      _
    // Predicated region
    $region10: #{tpu_custom_call.1} parent=1 // pred_check
      _
    $region11: #{tpu_custom_call.1} parent=1 // pred_check_branch
      %34 = sbr.rel (0) target = $region13
    $region12: #{tpu_custom_call.1} parent=1 // pred_region
      _
    $region13: #{tpu_custom_call.1} parent=1 // pred_fallthru
      _
    // Predicated region
    $region14: #{tpu_custom_call.1} parent=1 // pred_check
      _
    $region15: #{tpu_custom_call.1} parent=1 // pred_check_branch
      %36 = sbr.rel (0) target = $region17
    $region16: #{tpu_custom_call.1} parent=1 // pred_region
      %37 = dma.done [#allocation3], 256
    $region17: #{tpu_custom_call.1} parent=1 // pred_fallthru
      _
    // Predicated region
    $region18: #{tpu_custom_call.1} parent=1 // pred_check
      _
    $region19: #{tpu_custom_call.1} parent=1 // pred_check_branch
      %39 = sbr.rel (0) target = $region21
    $region20: #{tpu_custom_call.1} parent=1 // pred_region
      %40 = dma.done [#allocation6], 64
    $region21: #{tpu_custom_call.1} parent=1 // pred_fallthru
      _
    %v41 = vld [vmem:[#allocation2] sm:$0xff]
    %v42 = vld [vmem:[#allocation2 + $0x8] sm:$0xff]
    %v45 = vcombine.high %v41, %v41
    %v46 = vcombine.high %v42, %v42
    %vm49 = vcmask 1043456
    %v50 = vsel %vm49, %v41, 0.0
    %v51 = vsel %vm49, %v45, 0.0
    %v52 = vadd.f32 %v50, %v51
    %53 = vadd.xlane.f32.xlu0 %v52
    %v54 = vpop.xlane.xlu0 %53
    %v55 = vsel %vm49, %v42, 0.0
    %v56 = vsel %vm49, %v46, 0.0
    %v57 = vadd.f32 %v55, %v56
    %58 = vadd.xlane.f32.xlu0 %v57
    %v59 = vpop.xlane.xlu0 %58
    %v60 = vmul.f32 %v54, 0.00390625
    %v61 = vmul.f32 %v59, 0.00390625
    %v62 = vld [vmem:[#allocation5] sm:$0xf]
    %v63 = vld [vmem:[%s2] sm:$0x1]
    %v65 = vlaneseq
    %v66 = vshrl.u32 %v65, 7
    %v67 = vsub.s32 0, %v66
    %v68 = vrot.slane %v63, %v67
    %v72 = vlaneseq
    %v73 = vand.u32 %v72, 127
    %v74 = vlaneseq
    %v75 = vshrl.u32 %v74, 7
    %v76 = vsub.s32 %v73, %v75
    %v77 = vrot.slane %v60, %v76
    %v78 = vlaneseq
    %v79 = vshrl.u32 %v78, 7
    %v80 = vsub.s32 %v73, %v79
    %v81 = vrot.slane %v61, %v80
    %vm82 = vcmask 1041409
    %v83 = vsel %vm82, %v81, %v77
    %vm84 = vcmask 31744
    %v85 = vsel %vm84, %v83, 0
    %v88 = vsel %vm49, %v62, 0
    %90 = vmatprep.subr.mxu0 0.0
    %91 = vmatpush1.msra.mxu0 %v88
    %92 = vmatprep.subr.mxu0 0.0
    %93 = vmatpush1.msra.mxu0 0.0
    %94 = vmatprep.subr.mxu0 0.0
    %95 = vmatpush1.msra.mxu0 0.0
    %96 = vmatprep.subr.mxu0 0.0
    %97 = vmatpush1.msra.mxu0 0.0
    %98 = vmatprep.subr.mxu0 0.0
    %99 = vmatpush1.msra.mxu0 0.0
    %100 = vmatprep.subr.mxu0 0.0
    %101 = vmatpush1.msra.mxu0 0.0
    %102 = vmatprep.subr.mxu0 0.0
    %103 = vmatpush1.msra.mxu0 0.0
    %104 = vmatprep.subr.mxu0 0.0
    %105 = vmatpush1.msra.mxu0 0.0
    %106 = vmatprep.subr.mxu0 0.0
    %107 = vmatpush1.msra.mxu0 0.0
    %108 = vmatprep.subr.mxu0 0.0
    %109 = vmatpush1.msra.mxu0 0.0
    %110 = vmatprep.subr.mxu0 0.0
    %111 = vmatpush1.msra.mxu0 0.0
    %112 = vmatprep.subr.mxu0 0.0
    %113 = vmatpush1.msra.mxu0 0.0
    %114 = vmatprep.subr.mxu0 0.0
    %115 = vmatpush1.msra.mxu0 0.0
    %116 = vmatprep.subr.mxu0 0.0
    %117 = vmatpush1.msra.mxu0 0.0
    %118 = vmatprep.subr.mxu0 0.0
    %119 = vmatpush1.msra.mxu0 0.0
    %120 = vmatprep.subr.mxu0 0.0
    %121 = vmatpush1.msra.mxu0 0.0
    %122 = vmatprep.subr.mxu0 0.0
    %123 = vmatpush1.msra.mxu0 0.0
    %124 = vmatprep.subr.mxu0 0.0
    %125 = vmatpush1.msra.mxu0 0.0
    %126 = vmatprep.subr.mxu0 0.0
    %127 = vmatpush1.msra.mxu0 0.0
    %128 = vmatprep.subr.mxu0 0.0
    %129 = vmatpush1.msra.mxu0 0.0
    %130 = vmatprep.subr.mxu0 0.0
    %131 = vmatpush1.msra.mxu0 0.0
    %132 = vmatprep.subr.mxu0 0.0
    %133 = vmatpush1.msra.mxu0 0.0
    %134 = vmatprep.subr.mxu0 0.0
    %135 = vmatpush1.msra.mxu0 0.0
    %136 = vmatprep.subr.mxu0 0.0
    %137 = vmatpush1.msra.mxu0 0.0
    %138 = vmatprep.subr.mxu0 0.0
    %139 = vmatpush1.msra.mxu0 0.0
    %140 = vmatprep.subr.mxu0 0.0
    %141 = vmatpush1.msra.mxu0 0.0
    %142 = vmatprep.subr.mxu0 0.0
    %143 = vmatpush1.msra.mxu0 0.0
    %144 = vmatprep.subr.mxu0 0.0
    %145 = vmatpush1.msra.mxu0 0.0
    %146 = vmatprep.subr.mxu0 0.0
    %147 = vmatpush1.msra.mxu0 0.0
    %148 = vmatprep.subr.mxu0 0.0
    %149 = vmatpush1.msra.mxu0 0.0
    %150 = vmatprep.subr.mxu0 0.0
    %151 = vmatpush1.msra.mxu0 0.0
    %152 = vmatprep.subr.mxu0 0.0
    %153 = vmatpush1.msra.mxu0 0.0
    %154 = vmatprep.mubr.f32.mxu0 0.0
    %155 = vmatmul.mubr.f32.gmra.mrb[0].mxu0 %v85
    %v156 = vpop.f32.mrb[0].mxu0
    %v157 = vadd.f32 %v68, %v156
    %v158 = vpop.f32.mrb[0].mxu0
    %159 = vdwg.mxu0
    %160 = vst [vmem:[#allocation7] sm:$0x3] %v157
    // Predicated region
    $region22: #{tpu_custom_call.1} parent=1 // pred_check
      _
    $region23: #{tpu_custom_call.1} parent=1 // pred_check_branch
      %162 = sbr.rel (0) target = $region25
    $region24: #{tpu_custom_call.1} parent=1 // pred_region
      %s164 = ssub.s32 32, 32
      %165 = vsyncadd [#allocation4], %s164
      %s167 = sshll.u32 [#allocation7], 4
      %s168 = int_to_ptr.vmem [resolvable:$true] %s167
      %170 = dma.vmem_to_hbm [thread:$0]  %s168, 32, %s3, [#allocation4]
    $region25: #{tpu_custom_call.1} parent=1 // pred_fallthru
      _
    // Predicated region
    $region26: #{tpu_custom_call.1} parent=1 // pred_check
      _
    $region27: #{tpu_custom_call.1} parent=1 // pred_check_branch
      %172 = sbr.rel (0) target = $region29
    $region28: #{tpu_custom_call.1} parent=1 // pred_region
      %173 = dma.done [#allocation4], 32
    $region29: #{tpu_custom_call.1} parent=1 // pred_fallthru
      _
    %174 = vsyncpa [#allocation3], 1
    %175 = vsyncpa [#allocation6], 1
    %176 = vsyncpa [#allocation4], 1

</llo_original>
